<compile_context>
chip_gen: v5e
topology: v5e:2x2
jax: 0.10.0
libtpu: 0.0.40
codegen_flags: <defaults>
</compile_context>

<pallas_src>
import math

import jax
import jax.numpy as jnp
from jax.experimental import pallas as pl
from jax.experimental.pallas import tpu as pltpu

LN_EPS = 1e-7                      # DebertaV2Config.layer_norm_eps


def _default_vmem_limit():
    try:
        cap = int(pltpu.get_tpu_info().vmem_capacity_bytes)
        # ~3/4 of physical VMEM, capped: v5e/v6e (128MiB) -> 96MiB, v7x (64MiB) -> 48MiB.
        return int(min(cap * 3 // 4, 100 * 1024 * 1024))
    except Exception:
        return 64 * 1024 * 1024


_VMEM_LIMIT = _default_vmem_limit()


# ------------------------------ small helpers ------------------------------ #

def _round_up(x, m):
    return ((x + m - 1) // m) * m


def _pick(dim, target):
    """Return (tile, padded_dim): full dim if it fits one tile, else tiles."""
    if dim <= target:
        return dim, dim
    return target, _round_up(dim, target)


def _pad2(x, rows, cols):
    r, c = x.shape
    if r == rows and c == cols:
        return x
    return jnp.pad(x, ((0, rows - r), (0, cols - c)))


# ----------------------------- Pallas kernels ------------------------------ #

def _linear_kernel(x_ref, w_ref, b_ref, o_ref, acc_ref):
    k = pl.program_id(2)

    @pl.when(k == 0)
    def _():
        acc_ref[...] = jnp.zeros_like(acc_ref)

    acc_ref[...] += jnp.dot(x_ref[...], w_ref[...],
                            preferred_element_type=jnp.float32)

    @pl.when(k == pl.num_programs(2) - 1)
    def _():
        o_ref[...] = (acc_ref[...] + b_ref[...]).astype(o_ref.dtype)


def _ln_kernel(x_ref, g_ref, b_ref, o_ref):
    x = x_ref[...].astype(jnp.float32)
    mu = jnp.mean(x, axis=-1, keepdims=True)
    var = jnp.mean((x - mu) ** 2, axis=-1, keepdims=True)
    y = (x - mu) * jax.lax.rsqrt(var + LN_EPS) * g_ref[...] + b_ref[...]
    o_ref[...] = y.astype(o_ref.dtype)


def _linear_res_ln_kernel(x_ref, w_ref, b_ref, r_ref, g_ref, bln_ref, o_ref, acc_ref):
    k = pl.program_id(1)

    @pl.when(k == 0)
    def _():
        acc_ref[...] = jnp.zeros_like(acc_ref)

    acc_ref[...] += jnp.dot(x_ref[...], w_ref[...],
                            preferred_element_type=jnp.float32)

    @pl.when(k == pl.num_programs(1) - 1)
    def _():
        y = acc_ref[...] + b_ref[...] + r_ref[...].astype(jnp.float32)
        mu = jnp.mean(y, axis=-1, keepdims=True)
        var = jnp.mean((y - mu) ** 2, axis=-1, keepdims=True)
        out = (y - mu) * jax.lax.rsqrt(var + LN_EPS) * g_ref[...] + bln_ref[...]
        o_ref[...] = out.astype(o_ref.dtype)


def _ffn_kernel(x_ref, wi_ref, bi_ref, wo2_ref, bo2_ref, g_ref, bln_ref,
                o_ref, acc_ref):
    t = pl.program_id(1)

    @pl.when(t == 0)
    def _():
        acc_ref[...] = jnp.zeros_like(acc_ref)

    h = jnp.dot(x_ref[...], wi_ref[...],
                preferred_element_type=jnp.float32) + bi_ref[...]
    # TODO(synk): HF "gelu" is erf-exact; tanh approximation used here.
    h = jax.nn.gelu(h, approximate=True)
    acc_ref[...] += jnp.dot(h.astype(jnp.bfloat16), wo2_ref[...],
                            preferred_element_type=jnp.float32)

    @pl.when(t == pl.num_programs(1) - 1)
    def _():
        # residual read from the same x block (bf16) -- no separate operand.
        y = acc_ref[...] + bo2_ref[...] + x_ref[...].astype(jnp.float32)
        mu = jnp.mean(y, axis=-1, keepdims=True)
        var = jnp.mean((y - mu) ** 2, axis=-1, keepdims=True)
        out = (y - mu) * jax.lax.rsqrt(var + LN_EPS) * g_ref[...] + bln_ref[...]
        o_ref[...] = out.astype(o_ref.dtype)


def _make_attention_kernel(S, hid, H, Wp, scale):
    """Disentangled self-attention for one batch row.

    qkv_ref : [1, S, 3*hid] bf16   (fused Q|K|V projection of the tokens)
    pos_ref : [2*Wp, 3*hid] bf16   rows [0,Wp)  -> K-projection of the c2p
                                   delta table, rows [Wp,2Wp) -> Q-projection
                                   of the p2c delta table (lane x <-> delta).
    The c2p/p2c bias is built with two MXU matmuls + a log2(S)-step skew.
    """
    Dh = hid // H
    NEG = float(jnp.finfo(jnp.float32).min)

    def kernel(qkv_ref, pos_ref, mq_ref, mk_ref, o_ref, ctx_ref):
        qkv = qkv_ref[0]                       # [S, 3*hid] bf16
        pos = pos_ref[...]                     # [2*Wp, 3*hid] bf16

        # 2-D mask rebuilt from the 1-D attention mask (no [B,S,S] in HBM)
        m2 = mq_ref[0] * mk_ref[0]             # [S,1] * [1,S] -> [S,S]
        msk = m2 > 0.0

        # pre-scale q and the p2c (query-projected) table once: covers all of
        # q.k^T, c2p and p2c, so no per-head [S,S] scale multiply is needed.
        q_all = qkv[:, :hid] * scale           # [S, hid]  bf16
        k_all = qkv[:, hid:2 * hid]
        v_all = qkv[:, 2 * hid:]
        tk_all = pos[:Wp, hid:2 * hid]         # c2p table (key projection)
        tq_all = pos[Wp:, :hid] * scale        # p2c table (query projection)

        # per-row / per-column shift amounts for the relative "skew"
        row_shift = (S - 1) - jax.lax.broadcasted_iota(jnp.int32, (S, 1), 0)
        col_shift = (S - 1) - jax.lax.broadcasted_iota(jnp.int32, (1, S), 1)

        def skew_c2p(a):
            # a: [S, Wp] f32 -> out[i, j] = a[i, j + (S-1-i)]   (never wraps)
            out = a
            amt = 1
            while amt < S:
                rolled = jnp.concatenate([out[:, amt:], out[:, :amt]], axis=1)
                out = jnp.where((row_shift & amt) != 0, rolled, out)
                amt *= 2
            return out[:, :S]

        def skew_p2c(a):
            # a: [Wp, S] f32 -> out[i, j] = a[i + (S-1-j), j]   (never wraps)
            out = a
            amt = 1
            while amt < S:
                rolled = jnp.concatenate([out[amt:, :], out[:amt, :]], axis=0)
                out = jnp.where((col_shift & amt) != 0, rolled, out)
                amt *= 2
            return out[:S, :]

        dn = (((1,), (1,)), ((), ()))          # contract last dims: A @ B^T

        # Static loop over heads; each head's context is stored immediately
        # into the lane-dense (S, hid) scratch slab, so per-head [S,S]
        # intermediates are not kept live across heads and there is no concat.
        # TODO(synk): flash-style KV blocking (online softmax) for large S on
        # v7x's 64 MiB VMEM; not needed at these sizes.
        for h in range(H):
            sl = slice(h * Dh, (h + 1) * Dh)
            qh, kh, vh = q_all[:, sl], k_all[:, sl], v_all[:, sl]

            s = jax.lax.dot_general(qh, kh, dn,
                                    preferred_element_type=jnp.float32)      # [S,S]
            c2p = jax.lax.dot_general(qh, tk_all[:, sl], dn,
                                      preferred_element_type=jnp.float32)    # [S,Wp]
            p2c = jax.lax.dot_general(tq_all[:, sl], kh, dn,
                                      preferred_element_type=jnp.float32)    # [Wp,S]

            # bias[i,j] = q_i . pos_k[clip(i-j+K)] + k_j . pos_q[clip(i-j+K)]
            # TODO(synk): DeBERTa-v2 log-bucketed relative positions; linear
            # clipping is baked into the delta tables instead.
            sc = s + skew_c2p(c2p) + skew_p2c(p2c)
            sc = jnp.where(msk, sc, NEG)
            mx = jnp.max(sc, axis=-1, keepdims=True)
            e = jnp.exp(sc - mx)
            den = jnp.sum(e, axis=-1, keepdims=True)
            p = e * pl.reciprocal(den, approx=True)
            p = jnp.where(msk, p, 0.0)                     # XSoftmax semantics
            ctx_ref[:, sl] = jnp.dot(p.astype(jnp.bfloat16), vh,
                                     preferred_element_type=jnp.float32)

        o_ref[0] = ctx_ref[...].astype(o_ref.dtype)

    return kernel


# ------------------------------ Pallas wrappers ---------------------------- #

def linear(x, w, b, out_dtype=jnp.float32, tm_t=512, tn_t=256, tk_t=512):
    """Tiled y = x @ w + b; bf16 MXU operands, f32 accumulation."""
    M, K = x.shape
    _, N = w.shape
    tm, Mp = _pick(M, tm_t)
    tn, Np = _pick(N, tn_t)
    tk, Kp = _pick(K, tk_t)
    xp = _pad2(x, Mp, Kp).astype(jnp.bfloat16)
    wp = _pad2(w, Kp, Np).astype(jnp.bfloat16)
    bp = _pad2(b.astype(jnp.float32).reshape(1, N), 1, Np)
    out = pl.pallas_call(
        _linear_kernel,
        out_shape=jax.ShapeDtypeStruct((Mp, Np), out_dtype),
        grid=(Mp // tm, Np // tn, Kp // tk),
        in_specs=[
            pl.BlockSpec((tm, tk), lambda i, j, k: (i, k)),
            pl.BlockSpec((tk, tn), lambda i, j, k: (k, j)),
            pl.BlockSpec((1, tn), lambda i, j, k: (0, j)),
        ],
        out_specs=pl.BlockSpec((tm, tn), lambda i, j, k: (i, j)),
        scratch_shapes=[pltpu.VMEM((tm, tn), jnp.float32)],
        compiler_params=pltpu.CompilerParams(
            dimension_semantics=("parallel", "parallel", "arbitrary"),
            vmem_limit_bytes=_VMEM_LIMIT),
    )(xp, wp, bp)
    return out[:M, :N]


def layer_norm(x, g, b, out_dtype=jnp.bfloat16, tm_t=512):
    M, N = x.shape
    tm, Mp = _pick(M, tm_t)
    xp = _pad2(x, Mp, N)
    out = pl.pallas_call(
        _ln_kernel,
        out_shape=jax.ShapeDtypeStruct((Mp, N), out_dtype),
        grid=(Mp // tm,),
        in_specs=[
            pl.BlockSpec((tm, N), lambda i: (i, 0)),
            pl.BlockSpec((1, N), lambda i: (0, 0)),
            pl.BlockSpec((1, N), lambda i: (0, 0)),
        ],
        out_specs=pl.BlockSpec((tm, N), lambda i: (i, 0)),
        compiler_params=pltpu.CompilerParams(
            dimension_semantics=("parallel",),
            vmem_limit_bytes=_VMEM_LIMIT),
    )(xp, g.astype(jnp.float32).reshape(1, N), b.astype(jnp.float32).reshape(1, N))
    return out[:M]


def linear_res_ln(x, w, b, res, g, bln, tm_t=512, tk_t=512):
    """Fused: LayerNorm(x @ w + b + res), bf16 in / bf16 out, f32 math."""
    M, K = x.shape
    _, N = w.shape
    tm, Mp = _pick(M, tm_t)
    tk, Kp = _pick(K, tk_t)
    xp = _pad2(x, Mp, Kp).astype(jnp.bfloat16)
    wp = _pad2(w, Kp, N).astype(jnp.bfloat16)
    rp = _pad2(res, Mp, N).astype(jnp.bfloat16)
    out = pl.pallas_call(
        _linear_res_ln_kernel,
        out_shape=jax.ShapeDtypeStruct((Mp, N), jnp.bfloat16),
        grid=(Mp // tm, Kp // tk),
        in_specs=[
            pl.BlockSpec((tm, tk), lambda i, k: (i, k)),
            pl.BlockSpec((tk, N), lambda i, k: (k, 0)),
            pl.BlockSpec((1, N), lambda i, k: (0, 0)),
            pl.BlockSpec((tm, N), lambda i, k: (i, 0)),
            pl.BlockSpec((1, N), lambda i, k: (0, 0)),
            pl.BlockSpec((1, N), lambda i, k: (0, 0)),
        ],
        out_specs=pl.BlockSpec((tm, N), lambda i, k: (i, 0)),
        scratch_shapes=[pltpu.VMEM((tm, N), jnp.float32)],
        compiler_params=pltpu.CompilerParams(
            dimension_semantics=("parallel", "arbitrary"),
            vmem_limit_bytes=_VMEM_LIMIT),
    )(xp, wp, b.astype(jnp.float32).reshape(1, N), rp,
      g.astype(jnp.float32).reshape(1, N), bln.astype(jnp.float32).reshape(1, N))
    return out[:M]


def ffn_res_ln(x, wi, bi, wo2, bo2, g, bln, tm_t=512, ti_t=512):
    """Fused FFN: LayerNorm(gelu(x@wi+bi)@wo2 + bo2 + x); inter dim tiled,
    residual read from the same x block, bf16 in / bf16 out."""
    M, Hd = x.shape
    _, I = wi.shape
    tm, Mp = _pick(M, tm_t)
    ti, Ip = _pick(I, ti_t)
    xp = _pad2(x, Mp, Hd).astype(jnp.bfloat16)
    wip = _pad2(wi, Hd, Ip).astype(jnp.bfloat16)
    bip = _pad2(bi.astype(jnp.float32).reshape(1, I), 1, Ip)
    wo2p = _pad2(wo2, Ip, Hd).astype(jnp.bfloat16)
    out = pl.pallas_call(
        _ffn_kernel,
        out_shape=jax.ShapeDtypeStruct((Mp, Hd), jnp.bfloat16),
        grid=(Mp // tm, Ip // ti),
        in_specs=[
            pl.BlockSpec((tm, Hd), lambda i, t: (i, 0)),
            pl.BlockSpec((Hd, ti), lambda i, t: (0, t)),
            pl.BlockSpec((1, ti), lambda i, t: (0, t)),
            pl.BlockSpec((ti, Hd), lambda i, t: (t, 0)),
            pl.BlockSpec((1, Hd), lambda i, t: (0, 0)),
            pl.BlockSpec((1, Hd), lambda i, t: (0, 0)),
            pl.BlockSpec((1, Hd), lambda i, t: (0, 0)),
        ],
        out_specs=pl.BlockSpec((tm, Hd), lambda i, t: (i, 0)),
        scratch_shapes=[pltpu.VMEM((tm, Hd), jnp.float32)],
        compiler_params=pltpu.CompilerParams(
            dimension_semantics=("parallel", "arbitrary"),
            vmem_limit_bytes=_VMEM_LIMIT),
    )(xp, wip, bip, wo2p, bo2.astype(jnp.float32).reshape(1, Hd),
      g.astype(jnp.float32).reshape(1, Hd), bln.astype(jnp.float32).reshape(1, Hd))
    return out[:M]


def attention(qkv_all, pos_all, mq, mk, B, S, hid, H, Wp, scale):
    """Disentangled self-attention.

    qkv_all : [B + 2*Wp//S, S, 3*hid] bf16 (only the first B row-blocks, i.e.
              the token rows of the folded QKV matmul, are ever indexed)
    pos_all : [2*Wp, 3*hid] bf16  delta-expanded relative tables (projected)
    mq, mk  : [B, S, 1] / [B, 1, S] f32
    Returns [B, S, hid] bf16 context (lane-dense).
    """
    kern = _make_attention_kernel(S, hid, H, Wp, scale)
    return pl.pallas_call(
        kern,
        out_shape=jax.ShapeDtypeStruct((B, S, hid), jnp.bfloat16),
        grid=(B,),
        in_specs=[
            pl.BlockSpec((1, S, 3 * hid), lambda b: (b, 0, 0)),
            pl.BlockSpec((2 * Wp, 3 * hid), lambda b: (0, 0)),
            pl.BlockSpec((1, S, 1), lambda b: (b, 0, 0)),
            pl.BlockSpec((1, 1, S), lambda b: (b, 0, 0)),
        ],
        out_specs=pl.BlockSpec((1, S, hid), lambda b: (b, 0, 0)),
        scratch_shapes=[pltpu.VMEM((S, hid), jnp.float32)],
        compiler_params=pltpu.CompilerParams(
            dimension_semantics=("parallel",),
            vmem_limit_bytes=_VMEM_LIMIT),
    )(qkv_all, pos_all, mq, mk)


# ------------------------------- model glue -------------------------------- #

def init_params(key, cfg):
    hid, inter, K = cfg["hidden"], cfg["inter"], cfg["max_rel"]
    keys = iter(jax.random.split(key, 16 + 8 * cfg["layers"]))

    def wbf16(shape):  # MXU weights stored bf16
        return (0.02 * jax.random.normal(next(keys), shape, jnp.float32)).astype(jnp.bfloat16)

    def wf32(shape):
        return 0.02 * jax.random.normal(next(keys), shape, jnp.float32)

    params = {
        "word_emb": wf32((cfg["vocab"], hid)),
        "emb_ln_g": jnp.ones((hid,), jnp.float32),
        "emb_ln_b": jnp.zeros((hid,), jnp.float32),
        "rel_emb": wf32((2 * K, hid)),
        "rel_ln_g": jnp.ones((hid,), jnp.float32),
        "rel_ln_b": jnp.zeros((hid,), jnp.float32),
        "w_cls": wbf16((hid, cfg["num_labels"])),
        "b_cls": jnp.zeros((cfg["num_labels"],), jnp.float32),
        "layers": [],
    }
    for _ in range(cfg["layers"]):
        params["layers"].append({
            # fused QKV projection weight, columns = [wq | wk | wv]
            "wqkv": wbf16((hid, 3 * hid)),
            "bqkv": jnp.zeros((3 * hid,), jnp.float32),
            "wo": wbf16((hid, hid)), "bo": jnp.zeros((hid,), jnp.float32),
            "attn_ln_g": jnp.ones((hid,), jnp.float32),
            "attn_ln_b": jnp.zeros((hid,), jnp.float32),
            "wi": wbf16((hid, inter)), "bi": jnp.zeros((inter,), jnp.float32),
            "wo2": wbf16((inter, hid)), "bo2": jnp.zeros((hid,), jnp.float32),
            "ffn_ln_g": jnp.ones((hid,), jnp.float32),
            "ffn_ln_b": jnp.zeros((hid,), jnp.float32),
        })
    return params


def deberta_with_dropout_forward(params, input_ids, attention_mask, cfg):
    """Eval-mode forward: returns (logits, hidden_states)."""
    B, S = input_ids.shape
    hid, H, K = cfg["hidden"], cfg["heads"], cfg["max_rel"]
    Dh = hid // H
    K2 = 2 * K
    M = B * S
    Wp = 2 * S                      # delta-table width (padded to a multiple of S)
    # scale_factor = 1 + len(["c2p","p2c"]) = 3 (DeBERTa disentangled attention)
    scale = 1.0 / math.sqrt(Dh * 3.0)

    # --- embeddings: gather (glue) + LayerNorm (Pallas) + input mask ---
    # TODO(synk): absolute-position / token-type embeddings of DebertaV2Embeddings omitted.
    emb = jnp.take(params["word_emb"], input_ids, axis=0)                 # [B,S,hid] f32
    x = layer_norm(emb.reshape(M, hid), params["emb_ln_g"], params["emb_ln_b"])   # bf16
    x = x * attention_mask.reshape(M, 1).astype(jnp.bfloat16)
    hidden_states = [x.reshape(B, S, hid)]

    rel_ln = layer_norm(params["rel_emb"], params["rel_ln_g"], params["rel_ln_b"])  # [K2,hid] bf16

    # delta-expanded relative-embedding tables (tiny, built once per forward):
    #   c2p (key-proj) table lane x -> rel_ln[clip(S-1+K-x)]
    #   p2c (query-proj) table lane x -> rel_ln[clip(x-(S-1)+K)]
    xs = jnp.arange(Wp)
    idx_k = jnp.clip(S - 1 + K - xs, 0, K2 - 1)
    idx_q = jnp.clip(xs - (S - 1) + K, 0, K2 - 1)
    rel_k_rows = rel_ln[idx_k]                                            # [Wp, hid] bf16
    rel_q_rows = rel_ln[idx_q]                                            # [Wp, hid] bf16

    mq = attention_mask.astype(jnp.float32)[:, :, None]                   # [B,S,1]
    mk = attention_mask.astype(jnp.float32)[:, None, :]                   # [B,1,S]

    for lp in params["layers"]:
        xf = x                                                            # [M, hid] bf16

        # fold the relative-position projection into the QKV matmul
        # (share_att_key=True: rel tables go through the same Wq/Wk/bias).
        xcat = jnp.concatenate([xf, rel_k_rows, rel_q_rows], axis=0)      # [M+2Wp, hid]
        big = linear(xcat, lp["wqkv"], lp["bqkv"], out_dtype=jnp.bfloat16)  # [M+2Wp, 3hid]

        pos = big[M:]                                                     # [2Wp, 3hid] (tiny)
        big3 = big.reshape(B + (2 * Wp) // S, S, 3 * hid)                 # free reshape

        # disentangled attention (bias, mask, head slicing all in-kernel)
        ctx = attention(big3, pos, mq, mk, B, S, hid, H, Wp, scale)       # [B,S,hid] bf16
        ctx = ctx.reshape(M, hid)

        # self-output: dense + (dropout=id) + residual + LayerNorm, fused
        x2 = linear_res_ln(ctx, lp["wo"], lp["bo"], xf,
                           lp["attn_ln_g"], lp["attn_ln_b"])              # bf16

        # FFN: dense+GELU + dense + (dropout=id) + residual + LayerNorm, fused
        x = ffn_res_ln(x2, lp["wi"], lp["bi"], lp["wo2"], lp["bo2"],
                       lp["ffn_ln_g"], lp["ffn_ln_b"])                    # bf16
        hidden_states.append(x.reshape(B, S, hid))

    # --- classifier head: CLS pooling (dropout is identity in eval) ---
    pooled = x.reshape(B, S, hid)[:, 0, :]                                # [B, hid]
    logits = linear(pooled, params["w_cls"], params["b_cls"])             # [B, num_labels] f32
    return logits, tuple(hidden_states)


# ----------------------------------- main ----------------------------------- #

if __name__ == "__main__":
    cfg = dict(vocab=128, hidden=64, heads=2, layers=2, inter=128,
               seq=8, batch=2, num_labels=2, max_rel=8)

    root = jax.random.PRNGKey(0)
    pkey, ikey = jax.random.split(root)
    params = init_params(pkey, cfg)

    input_ids = jax.random.randint(ikey, (cfg["batch"], cfg["seq"]), 0, cfg["vocab"],
                                   dtype=jnp.int32)
    attention_mask = jnp.ones((cfg["batch"], cfg["seq"]), dtype=jnp.int32)

    logits, hiddens = deberta_with_dropout_forward(params, input_ids, attention_mask, cfg)
    logits = jax.block_until_ready(logits)

    assert logits.shape == (cfg["batch"], cfg["num_labels"])
    assert len(hiddens) == cfg["layers"] + 1
    assert bool(jnp.all(jnp.isfinite(logits.astype(jnp.float32))))
    print("KERNEL_OK")
</pallas_src>

<mosaic_0001>
module attributes {stable_mosaic.version = 11 : i64} {
  func.func @_ln_kernel(%arg0: i32, %arg1: memref<16x64xf32, #tpu.memory_space<vmem>>, %arg2: memref<1x64xf32, #tpu.memory_space<vmem>>, %arg3: memref<1x64xf32, #tpu.memory_space<vmem>>, %arg4: memref<16x64xbf16, #tpu.memory_space<vmem>>) attributes {dimension_semantics = [#tpu.dimension_semantics<parallel>], iteration_bounds = array<i64: 1>, scalar_prefetch = 0 : i64, scratch_operands = 0 : i64, tpu.core_type = #tpu.core_type<tc>, window_params = [{transform_indices = @transform_0, window_bounds = array<i64: 16, 64>}, {pipeline_mode = #tpu.pipeline_mode<synchronous>, transform_indices = @transform_1, window_bounds = array<i64: 1, 64>}, {pipeline_mode = #tpu.pipeline_mode<synchronous>, transform_indices = @transform_2, window_bounds = array<i64: 1, 64>}, {transform_indices = @transform_3, window_bounds = array<i64: 16, 64>}]} {
    %c0 = arith.constant 0 : index
    %c0_0 = arith.constant 0 : index
    %0 = vector.load %arg1[%c0, %c0_0] : memref<16x64xf32, #tpu.memory_space<vmem>>, vector<16x64xf32>
    %cst = arith.constant dense<0.000000e+00> : vector<16xf32>
    %1 = vector.multi_reduction <add>, %0, %cst [1] : vector<16x64xf32> to vector<16xf32>
    %2 = vector.shape_cast %1 : vector<16xf32> to vector<16x1xf32>
    %cst_1 = arith.constant 6.400000e+01 : f32
    %3 = vector.broadcast %cst_1 : f32 to vector<16x1xf32>
    %4 = arith.divf %2, %3 : vector<16x1xf32>
    %5 = vector.broadcast %4 : vector<16x1xf32> to vector<16x64xf32>
    %6 = arith.subf %0, %5 : vector<16x64xf32>
    %7 = arith.mulf %6, %6 : vector<16x64xf32>
    %cst_2 = arith.constant dense<0.000000e+00> : vector<16xf32>
    %8 = vector.multi_reduction <add>, %7, %cst_2 [1] : vector<16x64xf32> to vector<16xf32>
    %9 = vector.shape_cast %8 : vector<16xf32> to vector<16x1xf32>
    %cst_3 = arith.constant 6.400000e+01 : f32
    %10 = vector.broadcast %cst_3 : f32 to vector<16x1xf32>
    %11 = arith.divf %9, %10 : vector<16x1xf32>
    %12 = vector.broadcast %4 : vector<16x1xf32> to vector<16x64xf32>
    %13 = arith.subf %0, %12 : vector<16x64xf32>
    %cst_4 = arith.constant 1.000000e-07 : f32
    %14 = vector.broadcast %cst_4 : f32 to vector<16x1xf32>
    %15 = arith.addf %11, %14 : vector<16x1xf32>
    %16 = math.rsqrt %15 : vector<16x1xf32>
    %17 = vector.broadcast %16 : vector<16x1xf32> to vector<16x64xf32>
    %18 = arith.mulf %13, %17 : vector<16x64xf32>
    %c0_5 = arith.constant 0 : index
    %c0_6 = arith.constant 0 : index
    %19 = vector.load %arg2[%c0_5, %c0_6] : memref<1x64xf32, #tpu.memory_space<vmem>>, vector<1x64xf32>
    %20 = vector.broadcast %19 : vector<1x64xf32> to vector<16x64xf32>
    %21 = arith.mulf %18, %20 : vector<16x64xf32>
    %c0_7 = arith.constant 0 : index
    %c0_8 = arith.constant 0 : index
    %22 = vector.load %arg3[%c0_7, %c0_8] : memref<1x64xf32, #tpu.memory_space<vmem>>, vector<1x64xf32>
    %23 = vector.broadcast %22 : vector<1x64xf32> to vector<16x64xf32>
    %24 = arith.addf %21, %23 : vector<16x64xf32>
    %25 = arith.truncf %24 : vector<16x64xf32> to vector<16x64xbf16>
    %c0_9 = arith.constant 0 : index
    %c0_10 = arith.constant 0 : index
    %26 = vector.load %arg4[%c0_9, %c0_10] : memref<16x64xbf16, #tpu.memory_space<vmem>>, vector<16x64xbf16>
    tpu.vector_store %arg4[%c0_9, %c0_10], %25 {strides = array<i32>} : memref<16x64xbf16, #tpu.memory_space<vmem>>, vector<16x64xbf16>,
    return
  }
  func.func @transform_0(%arg0: i32) -> (i32, i32) {
    %c0_i32 = arith.constant 0 : i32
    %c0_i32_0 = arith.constant 0 : i32
    return %arg0, %c0_i32 : i32, i32
  }
  func.func @transform_1(%arg0: i32) -> (i32, i32) {
    %c0_i32 = arith.constant 0 : i32
    %c0_i32_0 = arith.constant 0 : i32
    %c0_i32_1 = arith.constant 0 : i32
    return %c0_i32, %c0_i32_0 : i32, i32
  }
  func.func @transform_2(%arg0: i32) -> (i32, i32) {
    %c0_i32 = arith.constant 0 : i32
    %c0_i32_0 = arith.constant 0 : i32
    %c0_i32_1 = arith.constant 0 : i32
    return %c0_i32, %c0_i32_0 : i32, i32
  }
  func.func @transform_3(%arg0: i32) -> (i32, i32) {
    %c0_i32 = arith.constant 0 : i32
    %c0_i32_0 = arith.constant 0 : i32
    return %arg0, %c0_i32 : i32, i32
  }
}

</mosaic_0001>

<llo_original>
// kernel: tpu_custom_call.1
$region0: #{tpu_custom_call.1}
  #allocation0 [shape = 'u32[]', space=smem, size = 0x4, offset = 0x4, fixed_abs, tag = 'smem constant byte address 0x4 - core index']
  #allocation1 [shape = 'u32[72,128]{1,0:T(1,128)}', space=vmem, size = 0x9000, scoped, tag = 'internal scratch']
  %s0 = inlined_call_operand.hbm [shape: f32[16,64], index: 0, kind: input, shape index: {}]
  %s1 = inlined_call_operand.hbm [shape: f32[1,64], index: 1, kind: input, shape index: {}]
  %s2 = inlined_call_operand.vmem [shape: f32[1,64], index: 2, kind: input, shape index: {}]
  %s3 = inlined_call_operand.hbm [shape: bf16[16,64], index: 3, kind: output, shape index: {}]
  %s4 = sld [smem:[#allocation0]]
  $region30: #{tpu_custom_call.1} parent=0
    _
  %s6 = ssub.s32 1, %s4
  %s7 = scalar_select 0, %s6, %s4
  $region1: #{tpu_custom_call.1} parent=0
    #allocation2 [shape = 'u8[8192]{0}', space=vmem, size = 0x2000, scoped, tag = 'input window, operand 0, single buffered']
    #allocation3 [shape = 's32[1]{0}', space=sflag, size = 0x4, scoped, tag = 'scoped memory for tpu_custom_call.1']
    #allocation4 [shape = 's32[1]{0}', space=sflag, size = 0x4, scoped, tag = 'scoped memory for tpu_custom_call.1']
    #allocation5 [shape = 'u8[512]{0}', space=vmem, size = 0x400, scoped, tag = 'input window, operand 1, single buffered']
    #allocation6 [shape = 's32[1]{0}', space=sflag, size = 0x4, scoped, tag = 'scoped memory for tpu_custom_call.1']
    #allocation7 [shape = 'u8[4096]{0}', space=vmem, size = 0x1000, scoped, tag = 'output window, operand 0, single buffered']
    %8 = vsyncpa [#allocation3], 0
    %9 = vsyncpa [#allocation6], 0
    %10 = vsyncpa [#allocation4], 0
    // Predicated region
    $region2: #{tpu_custom_call.1} parent=1 // pred_check
      _
    $region3: #{tpu_custom_call.1} parent=1 // pred_check_branch
      %12 = sbr.rel (0) target = $region5
    $region4: #{tpu_custom_call.1} parent=1 // pred_region
      %14 = vsyncadd [#allocation3], 0
      %s15 = sshll.u32 %s0, 4
      %s16 = int_to_ptr.hbm [resolvable:$true] %s15
      %s17 = sshll.u32 [#allocation2], 4
      %s18 = int_to_ptr.vmem [resolvable:$true] %s17
      %23 = dma.hbm_to_vmem [thread:$0]  %s16, 256, %s18, [#allocation3], 128, 128, 8
    $region5: #{tpu_custom_call.1} parent=1 // pred_fallthru
      _
    // Predicated region
    $region6: #{tpu_custom_call.1} parent=1 // pred_check
      _
    $region7: #{tpu_custom_call.1} parent=1 // pred_check_branch
      %25 = sbr.rel (0) target = $region9
    $region8: #{tpu_custom_call.1} parent=1 // pred_region
      %27 = vsyncadd [#allocation6], 0
      %s29 = sshll.u32 %s1, 4
      %s30 = int_to_ptr.hbm [resolvable:$true] %s29
      %s31 = sshll.u32 [#allocation5], 4
      %s32 = int_to_ptr.vmem [resolvable:$true] %s31
      %34 = dma.hbm_to_vmem [thread:$0]  %s30, 16, %s32, [#allocation6]
    $region9: #{tpu_custom_call.1} parent=1 // pred_fallthru
      _
    // Predicated region
    $region10: #{tpu_custom_call.1} parent=1 // pred_check
      _
    $region11: #{tpu_custom_call.1} parent=1 // pred_check_branch
      %36 = sbr.rel (0) target = $region13
    $region12: #{tpu_custom_call.1} parent=1 // pred_region
      _
    $region13: #{tpu_custom_call.1} parent=1 // pred_fallthru
      _
    // Predicated region
    $region14: #{tpu_custom_call.1} parent=1 // pred_check
      _
    $region15: #{tpu_custom_call.1} parent=1 // pred_check_branch
      %38 = sbr.rel (0) target = $region17
    $region16: #{tpu_custom_call.1} parent=1 // pred_region
      %40 = dma.done [#allocation3], 256
    $region17: #{tpu_custom_call.1} parent=1 // pred_fallthru
      _
    // Predicated region
    $region18: #{tpu_custom_call.1} parent=1 // pred_check
      _
    $region19: #{tpu_custom_call.1} parent=1 // pred_check_branch
      %42 = sbr.rel (0) target = $region21
    $region20: #{tpu_custom_call.1} parent=1 // pred_region
      %44 = dma.done [#allocation6], 16
    $region21: #{tpu_custom_call.1} parent=1 // pred_fallthru
      _
    %v45 = vld [vmem:[#allocation2] sm:$0xff]
    %v46 = vld [vmem:[#allocation2 + $0x8] sm:$0xff]
    %vm47 = vcmask 523264
    %v48 = vsel %vm47, %v45, 0.0
    %49 = vadd.xlane.f32.xlu0 %v48
    %v50 = vpop.xlane.xlu0 %49
    %v51 = vsel %vm47, %v46, 0.0
    %52 = vadd.xlane.f32.xlu0 %v51
    %v53 = vpop.xlane.xlu0 %52
    %v54 = vrcp.pop 64.0
    %v55 = vmul.f32 64.0, %v54
    %v56 = vsub.f32 1.0, %v55
    %v57 = vmul.f32 %v54, %v56
    %v58 = vadd.f32 %v54, %v57
    %vm59 = vweird.f32 %v54
    %v60 = vsel %vm59, %v54, %v58
    %v61 = vmul.f32 %v50, %v60
    %v62 = vmul.f32 %v53, %v60
    %v63 = vsub.f32 %v45, %v61
    %v64 = vsub.f32 %v46, %v62
    %v65 = vmul.f32 %v63, %v63
    %v66 = vmul.f32 %v64, %v64
    %v67 = vsel %vm47, %v65, 0.0
    %68 = vadd.xlane.f32.xlu0 %v67
    %v69 = vpop.xlane.xlu0 %68
    %v70 = vsel %vm47, %v66, 0.0
    %71 = vadd.xlane.f32.xlu0 %v70
    %v72 = vpop.xlane.xlu0 %71
    %v73 = vmul.f32 %v69, %v60
    %v74 = vmul.f32 %v72, %v60
    %v75 = vadd.f32 %v73, 1e-07
    %v76 = vadd.f32 %v74, 1e-07
    %v77 = vrsqrt.pop %v75
    %v78 = vmul.f32 %v77, %v75
    %v79 = vmul.f32 %v78, %v77
    %v80 = vmul.f32 0.5, %v79
    %v81 = vsub.f32 1.5, %v80
    %v82 = vmul.f32 %v77, %v81
    %vm83 = vweird.f32 %v75
    %vm84 = vweird.f32 %v77
    %vm85 = vmor %vm83, %vm84
    %v86 = vsel %vm85, %v77, %v82
    %v87 = vrsqrt.pop %v76
    %v88 = vmul.f32 %v87, %v76
    %v89 = vmul.f32 %v88, %v87
    %v90 = vmul.f32 0.5, %v89
    %v91 = vsub.f32 1.5, %v90
    %v92 = vmul.f32 %v87, %v91
    %vm93 = vweird.f32 %v76
    %vm94 = vweird.f32 %v87
    %vm95 = vmor %vm93, %vm94
    %v96 = vsel %vm95, %v87, %v92
    %v97 = vmul.f32 %v63, %v86
    %v98 = vmul.f32 %v64, %v96
    %v99 = vld [vmem:[#allocation5] sm:$0x1]
    %v101 = vperm.slane %v99, 0
    %v103 = vmul.f32 %v97, %v101
    %v104 = vmul.f32 %v98, %v101
    %v105 = vld [vmem:[%s2] sm:$0x1]
    %v107 = vperm.slane %v105, 0
    %v109 = vadd.f32 %v103, %v107
    %v110 = vadd.f32 %v104, %v107
    %v111 = vpack.c.bf16 %v109, %v109
    %v112 = vpack.c.bf16 %v110, %v110
    %vm113 = vcmask 519168
    %114 = vst.msk [vmem:[#allocation7] sm:$0xf] %vm113, %v111
    %115 = vst.msk [vmem:[#allocation7 + $0x4] sm:$0xf] %vm113, %v112
    // Predicated region
    $region22: #{tpu_custom_call.1} parent=1 // pred_check
      _
    $region23: #{tpu_custom_call.1} parent=1 // pred_check_branch
      %117 = sbr.rel (0) target = $region25
    $region24: #{tpu_custom_call.1} parent=1 // pred_region
      %119 = vsyncadd [#allocation4], 0
      %s120 = sshll.u32 [#allocation7], 4
      %s121 = int_to_ptr.vmem [resolvable:$true] %s120
      %s122 = sshll.u32 %s3, 4
      %s123 = int_to_ptr.hbm [resolvable:$true] %s122
      %128 = dma.vmem_to_hbm [thread:$0]  %s121, 128, %s123, [#allocation4], 64, 64, 4
    $region25: #{tpu_custom_call.1} parent=1 // pred_fallthru
      _
    // Predicated region
    $region26: #{tpu_custom_call.1} parent=1 // pred_check
      _
    $region27: #{tpu_custom_call.1} parent=1 // pred_check_branch
      %130 = sbr.rel (0) target = $region29
    $region28: #{tpu_custom_call.1} parent=1 // pred_region
      %132 = dma.done [#allocation4], 128
    $region29: #{tpu_custom_call.1} parent=1 // pred_fallthru
      _
    %133 = vsyncpa [#allocation3], 1
    %134 = vsyncpa [#allocation6], 1
    %135 = vsyncpa [#allocation4], 1

</llo_original>
